<compile_context>
chip_gen: v5e
topology: v5e:2x2
jax: 0.10.0
libtpu: 0.0.40
codegen_flags: <defaults>
</compile_context>

<pallas_src>
import functools

import jax
import jax.numpy as jnp
from jax.experimental import pallas as pl
from jax.experimental.pallas import tpu as pltpu

EPS = 1e-5
ALPHA = 0.99


# ----------------------------------------------------------------------------
# Pass 1: per-channel statistics -> scale/shift + running-stat updates
# ----------------------------------------------------------------------------
def _bn_stats_kernel(x_ref, w_ref, b_ref, rm_ref, rv_ref,          # inputs
                     scale_ref, shift_ref, rm_out_ref, rv_out_ref,  # outputs
                     sum_acc, sq_acc,                               # VMEM scratch
                     *, count):
    t = pl.program_id(0)

    @pl.when(t == 0)
    def _init():
        sum_acc[...] = jnp.zeros_like(sum_acc)
        sq_acc[...] = jnp.zeros_like(sq_acc)

    x = x_ref[...]                                        # (N, C, TILE_M) f32
    # lane reduction first (XLU), then reduce the small leading batch axis (VALU)
    s_part = jnp.sum(x, axis=2, keepdims=True)            # (N, C, 1)
    q_part = jnp.sum(x * x, axis=2, keepdims=True)        # (N, C, 1)
    sum_acc[...] += jnp.sum(s_part, axis=0, keepdims=True)  # (1, C, 1)
    sq_acc[...] += jnp.sum(q_part, axis=0, keepdims=True)   # (1, C, 1)

    @pl.when(t == pl.num_programs(0) - 1)
    def _finalize():
        inv_count = 1.0 / count
        mean = sum_acc[...] * inv_count                    # (1, C, 1)
        # Unbiased (ddof=1) variance: matches torch.var default used by the module.
        denom = 1.0 / max(count - 1, 1)                    # guard count == 1
        var = (sq_acc[...] - count * mean * mean) * denom
        var = jnp.maximum(var, 0.0)                        # guard tiny cancellation
        inv_std = jax.lax.rsqrt(var + EPS)

        scale = w_ref[...] * inv_std
        scale_ref[...] = scale
        shift_ref[...] = b_ref[...] - mean * scale

        rm_out_ref[...] = ALPHA * rm_ref[...] + (1.0 - ALPHA) * mean
        rv_out_ref[...] = ALPHA * rv_ref[...] + (1.0 - ALPHA) * var


# ----------------------------------------------------------------------------
# Pass 2: normalize -> out = x * scale + shift   (per-channel FMA)
# ----------------------------------------------------------------------------
def _bn_apply_kernel(x_ref, scale_ref, shift_ref, out_ref):
    out_ref[...] = x_ref[...] * scale_ref[...] + shift_ref[...]


def _pick_tile_m(hw, n, c, budget_bytes=4 * 1024 * 1024):
    """Largest multiple of 128 that divides hw and fits a ~4 MiB (N,C,TILE) block."""
    max_elems = max(budget_bytes // (4 * n * c), 128)
    best = None
    t = 128
    limit = min(hw, max_elems)
    while t <= limit:
        if hw % t == 0:
            best = t
        t += 128
    if best is None:
        # TODO(synk): mask the ragged tail instead of one full-width block when
        # H*W is not a multiple of 128 and is too large for a single block.
        best = hw
    return best


def batch_norm2d_train(x_nchw, weight, bias, running_mean, running_var,
                       *, tile_m=None, vmem_limit_bytes=32 * 1024 * 1024):
    """Training-mode forward of the custom BatchNorm2d.

    Returns (output_nchw, new_running_mean, new_running_var).
    """
    x_nchw = x_nchw.astype(jnp.float32)
    n, c, h, w = x_nchw.shape
    hw = h * w
    count = n * hw

    # Free reshape (contiguous merge of the last two dims) -- no transpose.
    x3 = x_nchw.reshape(n, c, hw)
    w3 = weight.astype(jnp.float32).reshape(1, c, 1)
    b3 = bias.astype(jnp.float32).reshape(1, c, 1)
    rm3 = running_mean.astype(jnp.float32).reshape(1, c, 1)
    rv3 = running_var.astype(jnp.float32).reshape(1, c, 1)

    if tile_m is None:
        tile_m = _pick_tile_m(hw, n, c)
    n_tiles = pl.cdiv(hw, tile_m)

    x_spec = pl.BlockSpec((n, c, tile_m), lambda t: (0, 0, t))
    col_spec = pl.BlockSpec((1, c, 1), lambda t: (0, 0, 0))
    col_shape = jax.ShapeDtypeStruct((1, c, 1), jnp.float32)

    # ---- pass 1: statistics (reduction axis -> "arbitrary") -------------------
    scale, shift, rm_new, rv_new = pl.pallas_call(
        functools.partial(_bn_stats_kernel, count=count),
        out_shape=(col_shape, col_shape, col_shape, col_shape),
        grid_spec=pltpu.PrefetchScalarGridSpec(
            num_scalar_prefetch=0,
            grid=(n_tiles,),
            in_specs=[x_spec, col_spec, col_spec, col_spec, col_spec],
            out_specs=(col_spec, col_spec, col_spec, col_spec),
            scratch_shapes=[pltpu.VMEM((1, c, 1), jnp.float32),
                            pltpu.VMEM((1, c, 1), jnp.float32)],
        ),
        compiler_params=pltpu.CompilerParams(
            dimension_semantics=("arbitrary",),
            vmem_limit_bytes=vmem_limit_bytes),
    )(x3, w3, b3, rm3, rv3)

    # ---- pass 2: normalize (independent tiles -> "parallel") ------------------
    out3 = pl.pallas_call(
        _bn_apply_kernel,
        out_shape=jax.ShapeDtypeStruct((n, c, hw), jnp.float32),
        grid_spec=pltpu.PrefetchScalarGridSpec(
            num_scalar_prefetch=0,
            grid=(n_tiles,),
            in_specs=[x_spec, col_spec, col_spec],
            out_specs=x_spec,
        ),
        compiler_params=pltpu.CompilerParams(
            dimension_semantics=("parallel",),
            vmem_limit_bytes=vmem_limit_bytes),
    )(x3, scale, shift)

    return (out3.reshape(n, c, h, w),
            rm_new.reshape(c),
            rv_new.reshape(c))


# ----------------------------------------------------------------------------
# Pure-JAX reference mirroring the PyTorch training branch
# ----------------------------------------------------------------------------
def _reference(x, weight, bias, running_mean, running_var):
    mean = jnp.mean(x, axis=(0, 2, 3), keepdims=True)
    var = jnp.var(x, axis=(0, 2, 3), keepdims=True, ddof=1)   # unbiased like torch.var
    out = (x - mean) / jnp.sqrt(var + EPS)
    out = out * weight.reshape(1, -1, 1, 1) + bias.reshape(1, -1, 1, 1)
    rm = ALPHA * running_mean + (1 - ALPHA) * mean.reshape(-1)
    rv = ALPHA * running_var + (1 - ALPHA) * var.reshape(-1)
    return out, rm, rv


if __name__ == "__main__":
    key = jax.random.PRNGKey(0)
    N, C, H, W = 2, 4, 16, 16

    x = jax.random.normal(key, (N, C, H, W), dtype=jnp.float32)

    # deterministic parameter init per the module's __init__
    weight = jnp.ones((C,), dtype=jnp.float32)          # nn.Parameter(torch.ones)
    bias = jnp.zeros((C,), dtype=jnp.float32)           # nn.Parameter(torch.zeros)
    running_mean = jnp.ones((C,), dtype=jnp.float32)    # buffer init = ones
    running_var = jnp.zeros((C,), dtype=jnp.float32)    # buffer init = zeros

    ref_out, ref_rm, ref_rv = _reference(x, weight, bias, running_mean, running_var)

    # default (auto-sized) tiling
    out, rm_new, rv_new = batch_norm2d_train(x, weight, bias, running_mean, running_var)
    jax.block_until_ready((out, rm_new, rv_new))
    assert jnp.allclose(out, ref_out, atol=1e-4, rtol=1e-4)
    assert jnp.allclose(rm_new, ref_rm, atol=1e-5, rtol=1e-4)
    assert jnp.allclose(rv_new, ref_rv, atol=1e-5, rtol=1e-4)

    # forced 128-lane tiles -> multi-tile grid, exercising the accumulate/finalize path
    out2, rm2, rv2 = batch_norm2d_train(x, weight, bias, running_mean, running_var,
                                        tile_m=128)
    jax.block_until_ready((out2, rm2, rv2))
    assert jnp.allclose(out2, ref_out, atol=1e-4, rtol=1e-4)
    assert jnp.allclose(rm2, ref_rm, atol=1e-5, rtol=1e-4)
    assert jnp.allclose(rv2, ref_rv, atol=1e-5, rtol=1e-4)

    print("KERNEL_OK")
</pallas_src>

<mosaic_0001>
module attributes {stable_mosaic.version = 11 : i64} {
  func.func @_bn_stats_kernel(%arg0: i32, %arg1: memref<2x4x256xf32, #tpu.memory_space<vmem>>, %arg2: memref<1x4x1xf32, #tpu.memory_space<vmem>>, %arg3: memref<1x4x1xf32, #tpu.memory_space<vmem>>, %arg4: memref<1x4x1xf32, #tpu.memory_space<vmem>>, %arg5: memref<1x4x1xf32, #tpu.memory_space<vmem>>, %arg6: memref<1x4x1xf32, #tpu.memory_space<vmem>>, %arg7: memref<1x4x1xf32, #tpu.memory_space<vmem>>, %arg8: memref<1x4x1xf32, #tpu.memory_space<vmem>>, %arg9: memref<1x4x1xf32, #tpu.memory_space<vmem>>, %arg10: memref<1x4x1xf32, #tpu.memory_space<vmem>>, %arg11: memref<1x4x1xf32, #tpu.memory_space<vmem>>) attributes {dimension_semantics = [#tpu.dimension_semantics<arbitrary>], iteration_bounds = array<i64: 1>, scalar_prefetch = 0 : i64, scratch_operands = 2 : i64, tpu.core_type = #tpu.core_type<tc>, window_params = [{transform_indices = @transform_0, window_bounds = array<i64: 2, 4, 256>}, {pipeline_mode = #tpu.pipeline_mode<synchronous>, transform_indices = @transform_1, window_bounds = array<i64: 1, 4, 1>}, {pipeline_mode = #tpu.pipeline_mode<synchronous>, transform_indices = @transform_2, window_bounds = array<i64: 1, 4, 1>}, {pipeline_mode = #tpu.pipeline_mode<synchronous>, transform_indices = @transform_3, window_bounds = array<i64: 1, 4, 1>}, {pipeline_mode = #tpu.pipeline_mode<synchronous>, transform_indices = @transform_4, window_bounds = array<i64: 1, 4, 1>}, {pipeline_mode = #tpu.pipeline_mode<synchronous>, transform_indices = @transform_5, window_bounds = array<i64: 1, 4, 1>}, {pipeline_mode = #tpu.pipeline_mode<synchronous>, transform_indices = @transform_6, window_bounds = array<i64: 1, 4, 1>}, {pipeline_mode = #tpu.pipeline_mode<synchronous>, transform_indices = @transform_7, window_bounds = array<i64: 1, 4, 1>}, {pipeline_mode = #tpu.pipeline_mode<synchronous>, transform_indices = @transform_8, window_bounds = array<i64: 1, 4, 1>}]} {
    %c0_i32 = arith.constant 0 : i32
    %0 = arith.cmpi eq, %arg0, %c0_i32 : i32
    %1 = arith.extui %0 : i1 to i32
    %c0_i32_0 = arith.constant 0 : i32
    %2 = arith.cmpi ne, %1, %c0_i32_0 : i32
    scf.if %2 {
      %cst_20 = arith.constant 0.000000e+00 : f32
      %22 = vector.broadcast %cst_20 : f32 to vector<1x4x1xf32>
      %c0_21 = arith.constant 0 : index
      %c0_22 = arith.constant 0 : index
      %c0_23 = arith.constant 0 : index
      %23 = vector.load %arg10[%c0_21, %c0_22, %c0_23] : memref<1x4x1xf32, #tpu.memory_space<vmem>>, vector<1x4x1xf32>
      tpu.vector_store %arg10[%c0_21, %c0_22, %c0_23], %22 {strides = array<i32>} : memref<1x4x1xf32, #tpu.memory_space<vmem>>, vector<1x4x1xf32>,
      %cst_24 = arith.constant 0.000000e+00 : f32
      %24 = vector.broadcast %cst_24 : f32 to vector<1x4x1xf32>
      %c0_25 = arith.constant 0 : index
      %c0_26 = arith.constant 0 : index
      %c0_27 = arith.constant 0 : index
      %25 = vector.load %arg11[%c0_25, %c0_26, %c0_27] : memref<1x4x1xf32, #tpu.memory_space<vmem>>, vector<1x4x1xf32>
      tpu.vector_store %arg11[%c0_25, %c0_26, %c0_27], %24 {strides = array<i32>} : memref<1x4x1xf32, #tpu.memory_space<vmem>>, vector<1x4x1xf32>,
    } else {
    }
    %c0 = arith.constant 0 : index
    %c0_1 = arith.constant 0 : index
    %c0_2 = arith.constant 0 : index
    %3 = vector.load %arg1[%c0, %c0_1, %c0_2] : memref<2x4x256xf32, #tpu.memory_space<vmem>>, vector<2x4x256xf32>
    %cst = arith.constant dense<0.000000e+00> : vector<2x4xf32>
    %4 = vector.multi_reduction <add>, %3, %cst [2] : vector<2x4x256xf32> to vector<2x4xf32>
    %5 = vector.shape_cast %4 : vector<2x4xf32> to vector<2x4x1xf32>
    %6 = arith.mulf %3, %3 : vector<2x4x256xf32>
    %cst_3 = arith.constant dense<0.000000e+00> : vector<2x4xf32>
    %7 = vector.multi_reduction <add>, %6, %cst_3 [2] : vector<2x4x256xf32> to vector<2x4xf32>
    %8 = vector.shape_cast %7 : vector<2x4xf32> to vector<2x4x1xf32>
    %c0_4 = arith.constant 0 : index
    %c0_5 = arith.constant 0 : index
    %c0_6 = arith.constant 0 : index
    %9 = vector.load %arg10[%c0_4, %c0_5, %c0_6] : memref<1x4x1xf32, #tpu.memory_space<vmem>>, vector<1x4x1xf32>
    %cst_7 = arith.constant dense<0.000000e+00> : vector<4x1xf32>
    %10 = vector.multi_reduction <add>, %5, %cst_7 [0] : vector<2x4x1xf32> to vector<4x1xf32>
    %11 = vector.shape_cast %10 : vector<4x1xf32> to vector<1x4x1xf32>
    %12 = arith.addf %9, %11 : vector<1x4x1xf32>
    %c0_8 = arith.constant 0 : index
    %c0_9 = arith.constant 0 : index
    %c0_10 = arith.constant 0 : index
    %13 = vector.load %arg10[%c0_8, %c0_9, %c0_10] : memref<1x4x1xf32, #tpu.memory_space<vmem>>, vector<1x4x1xf32>
    tpu.vector_store %arg10[%c0_8, %c0_9, %c0_10], %12 {strides = array<i32>} : memref<1x4x1xf32, #tpu.memory_space<vmem>>, vector<1x4x1xf32>,
    %c0_11 = arith.constant 0 : index
    %c0_12 = arith.constant 0 : index
    %c0_13 = arith.constant 0 : index
    %14 = vector.load %arg11[%c0_11, %c0_12, %c0_13] : memref<1x4x1xf32, #tpu.memory_space<vmem>>, vector<1x4x1xf32>
    %cst_14 = arith.constant dense<0.000000e+00> : vector<4x1xf32>
    %15 = vector.multi_reduction <add>, %8, %cst_14 [0] : vector<2x4x1xf32> to vector<4x1xf32>
    %16 = vector.shape_cast %15 : vector<4x1xf32> to vector<1x4x1xf32>
    %17 = arith.addf %14, %16 : vector<1x4x1xf32>
    %c0_15 = arith.constant 0 : index
    %c0_16 = arith.constant 0 : index
    %c0_17 = arith.constant 0 : index
    %18 = vector.load %arg11[%c0_15, %c0_16, %c0_17] : memref<1x4x1xf32, #tpu.memory_space<vmem>>, vector<1x4x1xf32>
    tpu.vector_store %arg11[%c0_15, %c0_16, %c0_17], %17 {strides = array<i32>} : memref<1x4x1xf32, #tpu.memory_space<vmem>>, vector<1x4x1xf32>,
    %c0_i32_18 = arith.constant 0 : i32
    %19 = arith.cmpi eq, %arg0, %c0_i32_18 : i32
    %20 = arith.extui %19 : i1 to i32
    %c0_i32_19 = arith.constant 0 : i32
    %21 = arith.cmpi ne, %20, %c0_i32_19 : i32
    scf.if %21 {
      %c0_20 = arith.constant 0 : index
      %c0_21 = arith.constant 0 : index
      %c0_22 = arith.constant 0 : index
      %22 = vector.load %arg10[%c0_20, %c0_21, %c0_22] : memref<1x4x1xf32, #tpu.memory_space<vmem>>, vector<1x4x1xf32>
      %cst_23 = arith.constant 0.001953125 : f32
      %23 = vector.broadcast %cst_23 : f32 to vector<1x4x1xf32>
      %24 = arith.mulf %22, %23 : vector<1x4x1xf32>
      %c0_24 = arith.constant 0 : index
      %c0_25 = arith.constant 0 : index
      %c0_26 = arith.constant 0 : index
      %25 = vector.load %arg11[%c0_24, %c0_25, %c0_26] : memref<1x4x1xf32, #tpu.memory_space<vmem>>, vector<1x4x1xf32>
      %cst_27 = arith.constant 5.120000e+02 : f32
      %26 = vector.broadcast %cst_27 : f32 to vector<1x4x1xf32>
      %27 = arith.mulf %26, %24 : vector<1x4x1xf32>
      %28 = arith.mulf %27, %24 : vector<1x4x1xf32>
      %29 = arith.subf %25, %28 : vector<1x4x1xf32>
      %cst_28 = arith.constant 0.00195694715 : f32
      %30 = vector.broadcast %cst_28 : f32 to vector<1x4x1xf32>
      %31 = arith.mulf %29, %30 : vector<1x4x1xf32>
      %cst_29 = arith.constant 0.000000e+00 : f32
      %32 = vector.broadcast %cst_29 : f32 to vector<1x4x1xf32>
      %33 = arith.maximumf %31, %32 : vector<1x4x1xf32>
      %cst_30 = arith.constant 9.99999974E-6 : f32
      %34 = vector.broadcast %cst_30 : f32 to vector<1x4x1xf32>
      %35 = arith.addf %33, %34 : vector<1x4x1xf32>
      %36 = math.rsqrt %35 : vector<1x4x1xf32>
      %c0_31 = arith.constant 0 : index
      %c0_32 = arith.constant 0 : index
      %c0_33 = arith.constant 0 : index
      %37 = vector.load %arg2[%c0_31, %c0_32, %c0_33] : memref<1x4x1xf32, #tpu.memory_space<vmem>>, vector<1x4x1xf32>
      %38 = arith.mulf %37, %36 : vector<1x4x1xf32>
      %c0_34 = arith.constant 0 : index
      %c0_35 = arith.constant 0 : index
      %c0_36 = arith.constant 0 : index
      %39 = vector.load %arg6[%c0_34, %c0_35, %c0_36] : memref<1x4x1xf32, #tpu.memory_space<vmem>>, vector<1x4x1xf32>
      tpu.vector_store %arg6[%c0_34, %c0_35, %c0_36], %38 {strides = array<i32>} : memref<1x4x1xf32, #tpu.memory_space<vmem>>, vector<1x4x1xf32>,
      %c0_37 = arith.constant 0 : index
      %c0_38 = arith.constant 0 : index
      %c0_39 = arith.constant 0 : index
      %40 = vector.load %arg3[%c0_37, %c0_38, %c0_39] : memref<1x4x1xf32, #tpu.memory_space<vmem>>, vector<1x4x1xf32>
      %41 = arith.mulf %24, %38 : vector<1x4x1xf32>
      %42 = arith.subf %40, %41 : vector<1x4x1xf32>
      %c0_40 = arith.constant 0 : index
      %c0_41 = arith.constant 0 : index
      %c0_42 = arith.constant 0 : index
      %43 = vector.load %arg7[%c0_40, %c0_41, %c0_42] : memref<1x4x1xf32, #tpu.memory_space<vmem>>, vector<1x4x1xf32>
      tpu.vector_store %arg7[%c0_40, %c0_41, %c0_42], %42 {strides = array<i32>} : memref<1x4x1xf32, #tpu.memory_space<vmem>>, vector<1x4x1xf32>,
      %c0_43 = arith.constant 0 : index
      %c0_44 = arith.constant 0 : index
      %c0_45 = arith.constant 0 : index
      %44 = vector.load %arg4[%c0_43, %c0_44, %c0_45] : memref<1x4x1xf32, #tpu.memory_space<vmem>>, vector<1x4x1xf32>
      %cst_46 = arith.constant 9.900000e-01 : f32
      %45 = vector.broadcast %cst_46 : f32 to vector<1x4x1xf32>
      %46 = arith.mulf %45, %44 : vector<1x4x1xf32>
      %cst_47 = arith.constant 0.00999999977 : f32
      %47 = vector.broadcast %cst_47 : f32 to vector<1x4x1xf32>
      %48 = arith.mulf %47, %24 : vector<1x4x1xf32>
      %49 = arith.addf %46, %48 : vector<1x4x1xf32>
      %c0_48 = arith.constant 0 : index
      %c0_49 = arith.constant 0 : index
      %c0_50 = arith.constant 0 : index
      %50 = vector.load %arg8[%c0_48, %c0_49, %c0_50] : memref<1x4x1xf32, #tpu.memory_space<vmem>>, vector<1x4x1xf32>
      tpu.vector_store %arg8[%c0_48, %c0_49, %c0_50], %49 {strides = array<i32>} : memref<1x4x1xf32, #tpu.memory_space<vmem>>, vector<1x4x1xf32>,
      %c0_51 = arith.constant 0 : index
      %c0_52 = arith.constant 0 : index
      %c0_53 = arith.constant 0 : index
      %51 = vector.load %arg5[%c0_51, %c0_52, %c0_53] : memref<1x4x1xf32, #tpu.memory_space<vmem>>, vector<1x4x1xf32>
      %cst_54 = arith.constant 9.900000e-01 : f32
      %52 = vector.broadcast %cst_54 : f32 to vector<1x4x1xf32>
      %53 = arith.mulf %52, %51 : vector<1x4x1xf32>
      %cst_55 = arith.constant 0.00999999977 : f32
      %54 = vector.broadcast %cst_55 : f32 to vector<1x4x1xf32>
      %55 = arith.mulf %54, %33 : vector<1x4x1xf32>
      %56 = arith.addf %53, %55 : vector<1x4x1xf32>
      %c0_56 = arith.constant 0 : index
      %c0_57 = arith.constant 0 : index
      %c0_58 = arith.constant 0 : index
      %57 = vector.load %arg9[%c0_56, %c0_57, %c0_58] : memref<1x4x1xf32, #tpu.memory_space<vmem>>, vector<1x4x1xf32>
      tpu.vector_store %arg9[%c0_56, %c0_57, %c0_58], %56 {strides = array<i32>} : memref<1x4x1xf32, #tpu.memory_space<vmem>>, vector<1x4x1xf32>,
    } else {
    }
    return
  }
  func.func @transform_0(%arg0: i32) -> (i32, i32, i32) {
    %c0_i32 = arith.constant 0 : i32
    %c0_i32_0 = arith.constant 0 : i32
    %c0_i32_1 = arith.constant 0 : i32
    return %c0_i32, %c0_i32_0, %arg0 : i32, i32, i32
  }
  func.func @transform_1(%arg0: i32) -> (i32, i32, i32) {
    %c0_i32 = arith.constant 0 : i32
    %c0_i32_0 = arith.constant 0 : i32
    %c0_i32_1 = arith.constant 0 : i32
    %c0_i32_2 = arith.constant 0 : i32
    return %c0_i32, %c0_i32_0, %c0_i32_1 : i32, i32, i32
  }
  func.func @transform_2(%arg0: i32) -> (i32, i32, i32) {
    %c0_i32 = arith.constant 0 : i32
    %c0_i32_0 = arith.constant 0 : i32
    %c0_i32_1 = arith.constant 0 : i32
    %c0_i32_2 = arith.constant 0 : i32
    return %c0_i32, %c0_i32_0, %c0_i32_1 : i32, i32, i32
  }
  func.func @transform_3(%arg0: i32) -> (i32, i32, i32) {
    %c0_i32 = arith.constant 0 : i32
    %c0_i32_0 = arith.constant 0 : i32
    %c0_i32_1 = arith.constant 0 : i32
    %c0_i32_2 = arith.constant 0 : i32
    return %c0_i32, %c0_i32_0, %c0_i32_1 : i32, i32, i32
  }
  func.func @transform_4(%arg0: i32) -> (i32, i32, i32) {
    %c0_i32 = arith.constant 0 : i32
    %c0_i32_0 = arith.constant 0 : i32
    %c0_i32_1 = arith.constant 0 : i32
    %c0_i32_2 = arith.constant 0 : i32
    return %c0_i32, %c0_i32_0, %c0_i32_1 : i32, i32, i32
  }
  func.func @transform_5(%arg0: i32) -> (i32, i32, i32) {
    %c0_i32 = arith.constant 0 : i32
    %c0_i32_0 = arith.constant 0 : i32
    %c0_i32_1 = arith.constant 0 : i32
    %c0_i32_2 = arith.constant 0 : i32
    return %c0_i32, %c0_i32_0, %c0_i32_1 : i32, i32, i32
  }
  func.func @transform_6(%arg0: i32) -> (i32, i32, i32) {
    %c0_i32 = arith.constant 0 : i32
    %c0_i32_0 = arith.constant 0 : i32
    %c0_i32_1 = arith.constant 0 : i32
    %c0_i32_2 = arith.constant 0 : i32
    return %c0_i32, %c0_i32_0, %c0_i32_1 : i32, i32, i32
  }
  func.func @transform_7(%arg0: i32) -> (i32, i32, i32) {
    %c0_i32 = arith.constant 0 : i32
    %c0_i32_0 = arith.constant 0 : i32
    %c0_i32_1 = arith.constant 0 : i32
    %c0_i32_2 = arith.constant 0 : i32
    return %c0_i32, %c0_i32_0, %c0_i32_1 : i32, i32, i32
  }
  func.func @transform_8(%arg0: i32) -> (i32, i32, i32) {
    %c0_i32 = arith.constant 0 : i32
    %c0_i32_0 = arith.constant 0 : i32
    %c0_i32_1 = arith.constant 0 : i32
    %c0_i32_2 = arith.constant 0 : i32
    return %c0_i32, %c0_i32_0, %c0_i32_1 : i32, i32, i32
  }
}

</mosaic_0001>

<llo_original>
// kernel: tpu_custom_call.1
$region0: #{tpu_custom_call.1}
  #allocation0 [shape = 'u32[]', space=smem, size = 0x4, offset = 0x4, fixed_abs, tag = 'smem constant byte address 0x4 - core index']
  #allocation1 [shape = 'u32[72,128]{1,0:T(1,128)}', space=vmem, size = 0x9000, scoped, tag = 'internal scratch']
  #allocation2 [shape = 'f32[1,4,1]{2,1,0:T(4,128)}', space=vmem, size = 0x800, scoped, tag = 'scratch operand']
  #allocation3 [shape = 'f32[1,4,1]{2,1,0:T(4,128)}', space=vmem, size = 0x800, scoped, tag = 'scratch operand']
  %s0 = inlined_call_operand.hbm [shape: f32[2,4,256], index: 0, kind: input, shape index: {}]
  %s1 = inlined_call_operand.vmem [shape: f32[1,4,1], index: 1, kind: input, shape index: {}]
  %s2 = inlined_call_operand.vmem [shape: f32[1,4,1], index: 2, kind: input, shape index: {}]
  %s3 = inlined_call_operand.vmem [shape: f32[1,4,1], index: 3, kind: input, shape index: {}]
  %s4 = inlined_call_operand.vmem [shape: f32[1,4,1], index: 4, kind: input, shape index: {}]
  %s5 = inlined_call_operand.vmem [shape: f32[1,4,1], index: 5, kind: output, shape index: {0}]
  %s6 = inlined_call_operand.vmem [shape: f32[1,4,1], index: 6, kind: output, shape index: {1}]
  %s7 = inlined_call_operand.vmem [shape: f32[1,4,1], index: 7, kind: output, shape index: {2}]
  %s8 = inlined_call_operand.vmem [shape: f32[1,4,1], index: 8, kind: output, shape index: {3}]
  %9 = xla_tuple %s5, %s6, %s7, %s8
  %s10 = sld [smem:[#allocation0]]
  $region66: #{tpu_custom_call.1} parent=0
    _
  %s12 = ssub.s32 1, %s10
  %s13 = scalar_select 0, %s12, %s10
  $region1: #{tpu_custom_call.1} parent=0
    #allocation4 [shape = 'u8[8192]{0}', space=vmem, size = 0x2000, scoped, tag = 'input window, operand 0, single buffered']
    #allocation5 [shape = 's32[1]{0}', space=sflag, size = 0x4, scoped, tag = 'scoped memory for tpu_custom_call.1']
    %14 = vsyncpa [#allocation5], 0
    // Predicated region
    $region2: #{tpu_custom_call.1} parent=1 // pred_check
      _
    $region3: #{tpu_custom_call.1} parent=1 // pred_check_branch
      %16 = sbr.rel (0) target = $region5
    $region4: #{tpu_custom_call.1} parent=1 // pred_region
      %18 = vsyncadd [#allocation5], 0
      %s19 = sshll.u32 %s0, 4
      %s20 = int_to_ptr.hbm [resolvable:$true] %s19
      %s21 = sshll.u32 [#allocation4], 4
      %s22 = int_to_ptr.vmem [resolvable:$true] %s21
      %27 = dma.hbm_to_vmem [thread:$0]  %s20, 256, %s22, [#allocation5], 128, 128, 8
    $region5: #{tpu_custom_call.1} parent=1 // pred_fallthru
      _
    // Predicated region
    $region6: #{tpu_custom_call.1} parent=1 // pred_check
      _
    $region7: #{tpu_custom_call.1} parent=1 // pred_check_branch
      %29 = sbr.rel (0) target = $region9
    $region8: #{tpu_custom_call.1} parent=1 // pred_region
      _
    $region9: #{tpu_custom_call.1} parent=1 // pred_fallthru
      _
    // Predicated region
    $region10: #{tpu_custom_call.1} parent=1 // pred_check
      _
    $region11: #{tpu_custom_call.1} parent=1 // pred_check_branch
      %31 = sbr.rel (0) target = $region13
    $region12: #{tpu_custom_call.1} parent=1 // pred_region
      _
    $region13: #{tpu_custom_call.1} parent=1 // pred_fallthru
      _
    // Predicated region
    $region14: #{tpu_custom_call.1} parent=1 // pred_check
      _
    $region15: #{tpu_custom_call.1} parent=1 // pred_check_branch
      %33 = sbr.rel (0) target = $region17
    $region16: #{tpu_custom_call.1} parent=1 // pred_region
      _
    $region17: #{tpu_custom_call.1} parent=1 // pred_fallthru
      _
    // Predicated region
    $region18: #{tpu_custom_call.1} parent=1 // pred_check
      _
    $region19: #{tpu_custom_call.1} parent=1 // pred_check_branch
      %35 = sbr.rel (0) target = $region21
    $region20: #{tpu_custom_call.1} parent=1 // pred_region
      _
    $region21: #{tpu_custom_call.1} parent=1 // pred_fallthru
      _
    // Predicated region
    $region22: #{tpu_custom_call.1} parent=1 // pred_check
      _
    $region23: #{tpu_custom_call.1} parent=1 // pred_check_branch
      %37 = sbr.rel (0) target = $region25
    $region24: #{tpu_custom_call.1} parent=1 // pred_region
      %39 = dma.done [#allocation5], 256
    $region25: #{tpu_custom_call.1} parent=1 // pred_fallthru
      _
    %p40 = scmp.eq.s32.totalorder 0, 0
    // Predicated region
    $region26: #{tpu_custom_call.1} parent=1 // pred_check
      %p41 = pneg %p40
    $region27: #{tpu_custom_call.1} parent=1 // pred_check_branch
      %43 = sbr.rel (%p41) target = $region29
    $region28: #{tpu_custom_call.1} parent=1 // pred_region
      %vm44 = vcmask 3072
      %45 = vst.msk [vmem:[#allocation2] sm:$0xf] %vm44, 0.0
      %46 = vst.msk [vmem:[#allocation3] sm:$0xf] %vm44, 0.0
    $region29: #{tpu_custom_call.1} parent=1 // pred_fallthru
      _
    %v47 = vld [vmem:[#allocation4] sm:$0xff]
    %v48 = vld [vmem:[#allocation4 + $0x8] sm:$0xff]
    %51 = vst [vmem:[#allocation1] ss:$2 sm:$0xff] %v47
    %v52 = vld.sshfl [vmem:[#allocation1] sm:$0xff pattern:$0x75316420]
    %v53 = vld.sshfl [vmem:[#allocation1 + $0x8] sm:$0xff pattern:$0x75316420]
    %s54 = scalar_lea.vmem [#allocation1], 16
    %55 = vst [vmem:[%s54] ss:$2 sm:$0xff] %v48
    %v56 = vld.sshfl [vmem:[#allocation1 + $0x10] sm:$0xff pattern:$0x75316420]
    %v57 = vld.sshfl [vmem:[#allocation1 + $0x18] sm:$0xff pattern:$0x75316420]
    %vm62 = vcmask 1043456
    %v63 = vsel %vm62, %v52, 0.0
    %v64 = vsel %vm62, %v53, 0.0
    %v65 = vadd.f32 %v63, %v64
    %66 = vadd.xlane.f32.xlu0 %v65
    %v67 = vpop.xlane.xlu0 %66
    %v68 = vsel %vm62, %v56, 0.0
    %v69 = vsel %vm62, %v57, 0.0
    %v70 = vadd.f32 %v68, %v69
    %71 = vadd.xlane.f32.xlu0 %v70
    %v72 = vpop.xlane.xlu0 %71
    %v73 = vmul.f32 %v47, %v47
    %v74 = vmul.f32 %v48, %v48
    %77 = vst [vmem:[#allocation1] ss:$2 sm:$0xff] %v73
    %v78 = vld.sshfl [vmem:[#allocation1] sm:$0xff pattern:$0x75316420]
    %v79 = vld.sshfl [vmem:[#allocation1 + $0x8] sm:$0xff pattern:$0x75316420]
    %s80 = scalar_lea.vmem [#allocation1], 16
    %81 = vst [vmem:[%s80] ss:$2 sm:$0xff] %v74
    %v82 = vld.sshfl [vmem:[#allocation1 + $0x10] sm:$0xff pattern:$0x75316420]
    %v83 = vld.sshfl [vmem:[#allocation1 + $0x18] sm:$0xff pattern:$0x75316420]
    %v88 = vsel %vm62, %v78, 0.0
    %v89 = vsel %vm62, %v79, 0.0
    %v90 = vadd.f32 %v88, %v89
    %91 = vadd.xlane.f32.xlu0 %v90
    %v92 = vpop.xlane.xlu0 %91
    %v93 = vsel %vm62, %v82, 0.0
    %v94 = vsel %vm62, %v83, 0.0
    %v95 = vadd.f32 %v93, %v94
    %96 = vadd.xlane.f32.xlu0 %v95
    %v97 = vpop.xlane.xlu0 %96
    %v98 = vld [vmem:[#allocation2] sm:$0xf]
    %v99 = vsel %vm62, %v67, 0.0
    %v100 = vsel %vm62, %v72, 0.0
    %v101 = vadd.f32 %v99, %v100
    %v102 = vadd.f32 %v98, %v101
    %vm103 = vcmask 3072
    %104 = vst.msk [vmem:[#allocation2] sm:$0xf] %vm103, %v102
    %v105 = vld [vmem:[#allocation3] sm:$0xf]
    %v106 = vsel %vm62, %v92, 0.0
    %v107 = vsel %vm62, %v97, 0.0
    %v108 = vadd.f32 %v106, %v107
    %v109 = vadd.f32 %v105, %v108
    %110 = vst.msk [vmem:[#allocation3] sm:$0xf] %vm103, %v109
    // Predicated region
    $region30: #{tpu_custom_call.1} parent=1 // pred_check
      %p111 = pneg %p40
    $region31: #{tpu_custom_call.1} parent=1 // pred_check_branch
      %113 = sbr.rel (%p111) target = $region33
    $region32: #{tpu_custom_call.1} parent=1 // pred_region
      %v114 = vld [vmem:[#allocation2] sm:$0xf]
      %v115 = vmul.f32 %v114, 0.001953125
      %v116 = vld [vmem:[#allocation3] sm:$0xf]
      %v117 = vmul.f32 %v115, 512.0
      %v118 = vmul.f32 %v117, %v115
      %v119 = vsub.f32 %v116, %v118
      %v120 = vmul.f32 %v119, 0.0019569471
      %v121 = vmax.f32 %v120, 0.0
      %v122 = vadd.f32 %v121, 1e-05
      %v123 = vrsqrt.pop %v122
      %v124 = vmul.f32 %v123, %v122
      %v125 = vmul.f32 %v124, %v123
      %v126 = vmul.f32 0.5, %v125
      %v127 = vsub.f32 1.5, %v126
      %v128 = vmul.f32 %v123, %v127
      %vm129 = vweird.f32 %v122
      %vm130 = vweird.f32 %v123
      %vm131 = vmor %vm129, %vm130
      %v132 = vsel %vm131, %v123, %v128
      %v133 = vld [vmem:[%s1] sm:$0xf]
      %v134 = vmul.f32 %v133, %v132
      %135 = vst.msk [vmem:[%s5] sm:$0xf] %vm103, %v134
      %v136 = vld [vmem:[%s2] sm:$0xf]
      %v137 = vmul.f32 %v115, %v134
      %v138 = vsub.f32 %v136, %v137
      %139 = vst.msk [vmem:[%s6] sm:$0xf] %vm103, %v138
      %v140 = vld [vmem:[%s3] sm:$0xf]
      %v141 = vmul.f32 %v140, 0.99
      %v142 = vmul.f32 %v115, 0.01
      %v143 = vadd.f32 %v141, %v142
      %144 = vst.msk [vmem:[%s7] sm:$0xf] %vm103, %v143
      %v145 = vld [vmem:[%s4] sm:$0xf]
      %v146 = vmul.f32 %v145, 0.99
      %v147 = vmul.f32 %v121, 0.01
      %v148 = vadd.f32 %v146, %v147
      %149 = vst.msk [vmem:[%s8] sm:$0xf] %vm103, %v148
    $region33: #{tpu_custom_call.1} parent=1 // pred_fallthru
      _
    // Predicated region
    $region34: #{tpu_custom_call.1} parent=1 // pred_check
      _
    $region35: #{tpu_custom_call.1} parent=1 // pred_check_branch
      %151 = sbr.rel (0) target = $region37
    $region36: #{tpu_custom_call.1} parent=1 // pred_region
      _
    $region37: #{tpu_custom_call.1} parent=1 // pred_fallthru
      _
    // Predicated region
    $region38: #{tpu_custom_call.1} parent=1 // pred_check
      _
    $region39: #{tpu_custom_call.1} parent=1 // pred_check_branch
      %153 = sbr.rel (0) target = $region41
    $region40: #{tpu_custom_call.1} parent=1 // pred_region
      _
    $region41: #{tpu_custom_call.1} parent=1 // pred_fallthru
      _
    // Predicated region
    $region42: #{tpu_custom_call.1} parent=1 // pred_check
      _
    $region43: #{tpu_custom_call.1} parent=1 // pred_check_branch
      %155 = sbr.rel (0) target = $region45
    $region44: #{tpu_custom_call.1} parent=1 // pred_region
      _
    $region45: #{tpu_custom_call.1} parent=1 // pred_fallthru
      _
    // Predicated region
    $region46: #{tpu_custom_call.1} parent=1 // pred_check
      _
    $region47: #{tpu_custom_call.1} parent=1 // pred_check_branch
      %157 = sbr.rel (0) target = $region49
    $region48: #{tpu_custom_call.1} parent=1 // pred_region
      _
    $region49: #{tpu_custom_call.1} parent=1 // pred_fallthru
      _
    // Predicated region
    $region50: #{tpu_custom_call.1} parent=1 // pred_check
      _
    $region51: #{tpu_custom_call.1} parent=1 // pred_check_branch
      %159 = sbr.rel (0) target = $region53
    $region52: #{tpu_custom_call.1} parent=1 // pred_region
      _
    $region53: #{tpu_custom_call.1} parent=1 // pred_fallthru
      _
    // Predicated region
    $region54: #{tpu_custom_call.1} parent=1 // pred_check
      _
    $region55: #{tpu_custom_call.1} parent=1 // pred_check_branch
      %161 = sbr.rel (0) target = $region57
    $region56: #{tpu_custom_call.1} parent=1 // pred_region
      _
    $region57: #{tpu_custom_call.1} parent=1 // pred_fallthru
      _
    // Predicated region
    $region58: #{tpu_custom_call.1} parent=1 // pred_check
      _
    $region59: #{tpu_custom_call.1} parent=1 // pred_check_branch
      %163 = sbr.rel (0) target = $region61
    $region60: #{tpu_custom_call.1} parent=1 // pred_region
      _
    $region61: #{tpu_custom_call.1} parent=1 // pred_fallthru
      _
    // Predicated region
    $region62: #{tpu_custom_call.1} parent=1 // pred_check
      _
    $region63: #{tpu_custom_call.1} parent=1 // pred_check_branch
      %165 = sbr.rel (0) target = $region65
    $region64: #{tpu_custom_call.1} parent=1 // pred_region
      _
    $region65: #{tpu_custom_call.1} parent=1 // pred_fallthru
      _
    %166 = vsyncpa [#allocation5], 1

</llo_original>
